<compile_context>
chip_gen: v5e
topology: v5e:2x2
jax: 0.10.0
libtpu: 0.0.40
codegen_flags: <defaults>
</compile_context>

<pallas_src>
import jax
import jax.numpy as jnp
from jax.experimental import pallas as pl
from jax.experimental.pallas import tpu as pltpu

LANE = 128  # TPU lane width


def _round_up(x, m):
    return (x + m - 1) // m * m


def autoencoder_kernel(x_ref,
                       w1_ref, b1_ref,
                       w2_ref, b2_ref,
                       w3_ref, b3_ref,
                       w4_ref, b4_ref,
                       out_ref):
    # x tile: [tm, state_dim] (features on the lane axis).
    # Matmul operands are cast to the packed weight dtype (f32 or bf16);
    # accumulation, bias add, relu and tanh stay in f32.
    x = x_ref[...].astype(w1_ref.dtype)

    # l1 + relu
    h1 = jnp.dot(x, w1_ref[...], preferred_element_type=jnp.float32) + b1_ref[...]
    h1 = jnp.maximum(h1, 0.0)

    # l2 + tanh -> representation, already placed at lanes
    # [state_dim : state_dim+subgoal_dim] of the fused lane layout; all other
    # lanes are tanh(0 + 0) = 0 exactly.
    rep = jnp.dot(h1.astype(w2_ref.dtype), w2_ref[...],
                  preferred_element_type=jnp.float32) + b2_ref[...]
    rep = jnp.tanh(rep)

    # l3 + relu (w3 rows are shifted by the same lane offset, so only the rep
    # lanes contribute; zero lanes contribute exact zeros).
    h3 = jnp.dot(rep.astype(w3_ref.dtype), w3_ref[...],
                 preferred_element_type=jnp.float32) + b3_ref[...]
    h3 = jnp.maximum(h3, 0.0)

    # l4 (no activation) -> reconstruction at lanes [0:state_dim]; lanes beyond
    # state_dim are exact zeros (zero weight cols, zero padded bias).
    rec = jnp.dot(h3.astype(w4_ref.dtype), w4_ref[...],
                  preferred_element_type=jnp.float32) + b4_ref[...]

    # Single fused, lane-dense, unmasked store: rec in [0:sd], rep in [sd:sd+sub].
    out_ref[...] = (rec + rep).astype(out_ref.dtype)


def pack_params(params, compute_dtype=jnp.float32):
    """One-time repack of PyTorch-convention params ([out, in] weights, [out]
    biases) into kernel-native layout with a FUSED output lane space:
      * fused width  = round_up(state_dim + subgoal_dim, 128)
      * rec occupies fused lanes [0:state_dim]
      * rep occupies fused lanes [state_dim:state_dim+subgoal_dim]
    Weights: [in_pad, out_pad] in `compute_dtype`, zero-padded.
    Biases : [1, out_pad] float32, zero-padded (padding MUST stay zero so the
    fused rec+rep write is exact).
    Use compute_dtype=jnp.bfloat16 on v6e/v7x for full-rate MXU; keep float32
    on v5e (no bf16 VPU/EUP, and the kernel is HBM/overhead-bound anyway)."""
    w1, b1 = params["l1"]
    w2, b2 = params["l2"]
    w3, b3 = params["l3"]
    w4, b4 = params["l4"]

    hidden = w1.shape[0]
    state_dim = w1.shape[1]
    subgoal_dim = w2.shape[0]

    hid_p = _round_up(hidden, LANE)
    fused_p = _round_up(state_dim + subgoal_dim, LANE)
    rep_off = state_dim  # representation lanes start here in the fused layout

    def zeros_w(pad_in, pad_out):
        return jnp.zeros((pad_in, pad_out), compute_dtype)

    def zeros_b(pad_out):
        return jnp.zeros((1, pad_out), jnp.float32)

    # l1: state -> hidden (hidden on the lane axis, padded to hid_p)
    w1k = zeros_w(state_dim, hid_p).at[:, :hidden].set(w1.T.astype(compute_dtype))
    b1k = zeros_b(hid_p).at[:, :hidden].set(b1.astype(jnp.float32))

    # l2: hidden -> rep, placed at fused lanes [rep_off : rep_off+subgoal_dim]
    w2k = zeros_w(hid_p, fused_p).at[:hidden, rep_off:rep_off + subgoal_dim].set(
        w2.T.astype(compute_dtype))
    b2k = zeros_b(fused_p).at[:, rep_off:rep_off + subgoal_dim].set(
        b2.astype(jnp.float32))

    # l3: rep (read from the same fused lane offset) -> hidden
    w3k = zeros_w(fused_p, hid_p).at[rep_off:rep_off + subgoal_dim, :hidden].set(
        w3.T.astype(compute_dtype))
    b3k = zeros_b(hid_p).at[:, :hidden].set(b3.astype(jnp.float32))

    # l4: hidden -> rec, placed at fused lanes [0 : state_dim]
    w4k = zeros_w(hid_p, fused_p).at[:hidden, :state_dim].set(
        w4.T.astype(compute_dtype))
    b4k = zeros_b(fused_p).at[:, :state_dim].set(b4.astype(jnp.float32))

    return {
        "l1": (w1k, b1k),
        "l2": (w2k, b2k),
        "l3": (w3k, b3k),
        "l4": (w4k, b4k),
        "dims": (state_dim, subgoal_dim, hidden, fused_p, rep_off),
    }


def _pick_tile(B, desired_tm):
    """Choose a batch tile that (a) is at most `desired_tm` (capped at 4096 so
    double-buffered tiles stay far inside v7x's 32 MiB scoped VMEM default),
    (b) keeps >=4 grid steps when possible so v7x's two TensorCores both get
    work on the parallel batch axis, and (c) divides B exactly so the wrapper
    never needs a jnp.pad HBM round-trip."""
    desired = min(desired_tm, 4096)
    target = min(desired, max(8, _round_up(pl.cdiv(B, 4), 8)))
    if target >= B:
        return B                      # single full-extent tile, always legal
    if B % target == 0:
        return target
    # Largest multiple of 8 that divides B and is <= target.
    for t in range(min(target, B) // 8 * 8, 0, -8):
        if B % t == 0:
            return t
    return B                          # fall back: one full-extent tile, no padding


def autoencoder_forward(state, packed, *, tm=2048, out_dtype=jnp.float32):
    """state: [B, state_dim] float32. packed: output of pack_params.
    Returns (representation [B, subgoal_dim], reconstruction [B, state_dim])."""
    B, state_dim = state.shape
    sd, sub, _hid, fused_p, rep_off = packed["dims"]
    assert state_dim == sd

    w1k, b1k = packed["l1"]
    w2k, b2k = packed["l2"]
    w3k, b3k = packed["l3"]
    w4k, b4k = packed["l4"]

    tile = _pick_tile(B, tm)
    grid = (B // tile,)

    # Weights/biases: constant block index -> DMA'd once, VMEM-resident across
    # all batch tiles.  (pipeline_mode=pl.Buffered(1) would shave ~200 KiB of
    # redundant double-buffering, but the VMEM budget here is tiny either way.)
    def resident(arr):
        return pl.BlockSpec(arr.shape, lambda i: (0, 0))

    fused = pl.pallas_call(
        autoencoder_kernel,
        grid=grid,
        in_specs=[
            pl.BlockSpec((tile, state_dim), lambda i: (i, 0)),  # streamed state tiles
            resident(w1k), resident(b1k),
            resident(w2k), resident(b2k),
            resident(w3k), resident(b3k),
            resident(w4k), resident(b4k),
        ],
        out_specs=pl.BlockSpec((tile, fused_p), lambda i: (i, 0)),
        out_shape=jax.ShapeDtypeStruct((B, fused_p), out_dtype),
        compiler_params=pltpu.CompilerParams(
            # Shard batch tiles across TensorCores on v7x; explicit VMEM budget
            # fits every generation's scoped default (v5e 16 / v6e 32 / v7x 32 MiB).
            dimension_semantics=("parallel",),
            vmem_limit_bytes=32 * 1024 * 1024),
    )(state, w1k, b1k, w2k, b2k, w3k, b3k, w4k, b4k)

    # Slice the two column ranges out of the single fused, lane-dense output.
    representation = fused[:, rep_off:rep_off + sub]
    reconstruction = fused[:, :sd]
    return representation, reconstruction


def init_params(key, state_dim, subgoal_dim, hidden):
    """Deterministic init. Weights in PyTorch [out, in] convention (reference)."""
    dims = [
        ("l1", state_dim, hidden),
        ("l2", hidden, subgoal_dim),
        ("l3", subgoal_dim, hidden),
        ("l4", hidden, state_dim),
    ]
    params = {}
    for name, fan_in, fan_out in dims:
        key, kw, kb = jax.random.split(key, 3)
        bound = 1.0 / jnp.sqrt(fan_in)
        w = jax.random.uniform(kw, (fan_out, fan_in), jnp.float32, -bound, bound)
        b = jax.random.uniform(kb, (fan_out,), jnp.float32, -bound, bound)
        params[name] = (w, b)
    return params


def reference_forward(state, params):
    """Pure-JAX reference reproducing the PyTorch forward."""
    w1, b1 = params["l1"]
    w2, b2 = params["l2"]
    w3, b3 = params["l3"]
    w4, b4 = params["l4"]
    rep = jax.nn.relu(state @ w1.T + b1)
    rep = jnp.tanh(rep @ w2.T + b2)
    rec = jax.nn.relu(rep @ w3.T + b3)
    rec = rec @ w4.T + b4
    return rep, rec


if __name__ == "__main__":
    state_dim, subgoal_dim, hidden = 32, 8, 128

    key = jax.random.PRNGKey(0)
    key, kx = jax.random.split(key)
    params = init_params(key, state_dim, subgoal_dim, hidden)
    packed_f32 = pack_params(params)  # packed once; no per-call transposes

    # --- small batch (single tile, grid=(1,)), f32 path ---
    B_small = 8
    state_small = jax.random.normal(kx, (B_small, state_dim), jnp.float32)
    rep, rec = jax.block_until_ready(autoencoder_forward(state_small, packed_f32))
    rep_ref, rec_ref = reference_forward(state_small, params)
    assert rep.shape == (B_small, subgoal_dim) and rec.shape == (B_small, state_dim)
    assert jnp.allclose(rep, rep_ref, atol=1e-5, rtol=1e-5)
    assert jnp.allclose(rec, rec_ref, atol=1e-5, rtol=1e-5)

    # --- larger batch: real grid (4 parallel tiles of 256 rows), resident weights ---
    B_big = 1024
    key, kb = jax.random.split(key)
    state_big = jax.random.normal(kb, (B_big, state_dim), jnp.float32)
    rep_b, rec_b = jax.block_until_ready(autoencoder_forward(state_big, packed_f32))
    rep_bref, rec_bref = reference_forward(state_big, params)
    assert jnp.allclose(rep_b, rep_bref, atol=1e-5, rtol=1e-5)
    assert jnp.allclose(rec_b, rec_bref, atol=1e-5, rtol=1e-5)

    # --- bf16 matmul operands (full-rate MXU on v6e/v7x), f32 accumulation ---
    packed_bf16 = pack_params(params, compute_dtype=jnp.bfloat16)
    rep_h, rec_h = jax.block_until_ready(autoencoder_forward(state_big, packed_bf16))
    assert jnp.allclose(rep_h, rep_bref, atol=5e-2, rtol=5e-2)
    assert jnp.allclose(rec_h, rec_bref, atol=5e-2, rtol=5e-2)

    # --- optional bf16 output (v6e HBM-writeback win for callers that accept it) ---
    rep_o, rec_o = jax.block_until_ready(
        autoencoder_forward(state_big, packed_f32, out_dtype=jnp.bfloat16))
    assert jnp.allclose(rep_o.astype(jnp.float32), rep_bref, atol=5e-2, rtol=5e-2)
    assert jnp.allclose(rec_o.astype(jnp.float32), rec_bref, atol=5e-2, rtol=5e-2)

    print("KERNEL_OK")
</pallas_src>

<mosaic_0001>
module attributes {stable_mosaic.version = 11 : i64} {
  func.func @autoencoder_kernel(%arg0: i32, %arg1: memref<8x32xf32, #tpu.memory_space<vmem>>, %arg2: memref<32x128xf32, #tpu.memory_space<vmem>>, %arg3: memref<1x128xf32, #tpu.memory_space<vmem>>, %arg4: memref<128x128xf32, #tpu.memory_space<vmem>>, %arg5: memref<1x128xf32, #tpu.memory_space<vmem>>, %arg6: memref<128x128xf32, #tpu.memory_space<vmem>>, %arg7: memref<1x128xf32, #tpu.memory_space<vmem>>, %arg8: memref<128x128xf32, #tpu.memory_space<vmem>>, %arg9: memref<1x128xf32, #tpu.memory_space<vmem>>, %arg10: memref<8x128xf32, #tpu.memory_space<vmem>>) attributes {dimension_semantics = [#tpu.dimension_semantics<parallel>], iteration_bounds = array<i64: 1>, scalar_prefetch = 0 : i64, scratch_operands = 0 : i64, tpu.core_type = #tpu.core_type<tc>, window_params = [{transform_indices = @transform_0, window_bounds = array<i64: 8, 32>}, {pipeline_mode = #tpu.pipeline_mode<synchronous>, transform_indices = @transform_1, window_bounds = array<i64: 32, 128>}, {pipeline_mode = #tpu.pipeline_mode<synchronous>, transform_indices = @transform_2, window_bounds = array<i64: 1, 128>}, {pipeline_mode = #tpu.pipeline_mode<synchronous>, transform_indices = @transform_3, window_bounds = array<i64: 128, 128>}, {pipeline_mode = #tpu.pipeline_mode<synchronous>, transform_indices = @transform_4, window_bounds = array<i64: 1, 128>}, {pipeline_mode = #tpu.pipeline_mode<synchronous>, transform_indices = @transform_5, window_bounds = array<i64: 128, 128>}, {pipeline_mode = #tpu.pipeline_mode<synchronous>, transform_indices = @transform_6, window_bounds = array<i64: 1, 128>}, {pipeline_mode = #tpu.pipeline_mode<synchronous>, transform_indices = @transform_7, window_bounds = array<i64: 128, 128>}, {pipeline_mode = #tpu.pipeline_mode<synchronous>, transform_indices = @transform_8, window_bounds = array<i64: 1, 128>}, {transform_indices = @transform_9, window_bounds = array<i64: 8, 128>}]} {
    %c0 = arith.constant 0 : index
    %c0_0 = arith.constant 0 : index
    %0 = vector.load %arg1[%c0, %c0_0] : memref<8x32xf32, #tpu.memory_space<vmem>>, vector<8x32xf32>
    %c0_1 = arith.constant 0 : index
    %c0_2 = arith.constant 0 : index
    %1 = vector.load %arg2[%c0_1, %c0_2] : memref<32x128xf32, #tpu.memory_space<vmem>>, vector<32x128xf32>
    %cst = arith.constant dense<0.000000e+00> : vector<8x128xf32>
    %2 = tpu.matmul %0, %1, %cst {dimension_numbers = #tpu.dot_dimension_numbers<[1], [0], [0], [1], [0, 0, 1, 1], [], []>} : vector<8x32xf32>, vector<32x128xf32>, vector<8x128xf32> -> vector<8x128xf32>
    %c0_3 = arith.constant 0 : index
    %c0_4 = arith.constant 0 : index
    %3 = vector.load %arg3[%c0_3, %c0_4] : memref<1x128xf32, #tpu.memory_space<vmem>>, vector<1x128xf32>
    %4 = vector.broadcast %3 : vector<1x128xf32> to vector<8x128xf32>
    %5 = arith.addf %2, %4 : vector<8x128xf32>
    %cst_5 = arith.constant 0.000000e+00 : f32
    %6 = vector.broadcast %cst_5 : f32 to vector<8x128xf32>
    %7 = arith.maximumf %5, %6 : vector<8x128xf32>
    %c0_6 = arith.constant 0 : index
    %c0_7 = arith.constant 0 : index
    %8 = vector.load %arg4[%c0_6, %c0_7] : memref<128x128xf32, #tpu.memory_space<vmem>>, vector<128x128xf32>
    %cst_8 = arith.constant dense<0.000000e+00> : vector<8x128xf32>
    %9 = tpu.matmul %7, %8, %cst_8 {dimension_numbers = #tpu.dot_dimension_numbers<[1], [0], [0], [1], [0, 0, 1, 1], [], []>} : vector<8x128xf32>, vector<128x128xf32>, vector<8x128xf32> -> vector<8x128xf32>
    %c0_9 = arith.constant 0 : index
    %c0_10 = arith.constant 0 : index
    %10 = vector.load %arg5[%c0_9, %c0_10] : memref<1x128xf32, #tpu.memory_space<vmem>>, vector<1x128xf32>
    %11 = vector.broadcast %10 : vector<1x128xf32> to vector<8x128xf32>
    %12 = arith.addf %9, %11 : vector<8x128xf32>
    %13 = math.tanh %12 : vector<8x128xf32>
    %c0_11 = arith.constant 0 : index
    %c0_12 = arith.constant 0 : index
    %14 = vector.load %arg6[%c0_11, %c0_12] : memref<128x128xf32, #tpu.memory_space<vmem>>, vector<128x128xf32>
    %cst_13 = arith.constant dense<0.000000e+00> : vector<8x128xf32>
    %15 = tpu.matmul %13, %14, %cst_13 {dimension_numbers = #tpu.dot_dimension_numbers<[1], [0], [0], [1], [0, 0, 1, 1], [], []>} : vector<8x128xf32>, vector<128x128xf32>, vector<8x128xf32> -> vector<8x128xf32>
    %c0_14 = arith.constant 0 : index
    %c0_15 = arith.constant 0 : index
    %16 = vector.load %arg7[%c0_14, %c0_15] : memref<1x128xf32, #tpu.memory_space<vmem>>, vector<1x128xf32>
    %17 = vector.broadcast %16 : vector<1x128xf32> to vector<8x128xf32>
    %18 = arith.addf %15, %17 : vector<8x128xf32>
    %cst_16 = arith.constant 0.000000e+00 : f32
    %19 = vector.broadcast %cst_16 : f32 to vector<8x128xf32>
    %20 = arith.maximumf %18, %19 : vector<8x128xf32>
    %c0_17 = arith.constant 0 : index
    %c0_18 = arith.constant 0 : index
    %21 = vector.load %arg8[%c0_17, %c0_18] : memref<128x128xf32, #tpu.memory_space<vmem>>, vector<128x128xf32>
    %cst_19 = arith.constant dense<0.000000e+00> : vector<8x128xf32>
    %22 = tpu.matmul %20, %21, %cst_19 {dimension_numbers = #tpu.dot_dimension_numbers<[1], [0], [0], [1], [0, 0, 1, 1], [], []>} : vector<8x128xf32>, vector<128x128xf32>, vector<8x128xf32> -> vector<8x128xf32>
    %c0_20 = arith.constant 0 : index
    %c0_21 = arith.constant 0 : index
    %23 = vector.load %arg9[%c0_20, %c0_21] : memref<1x128xf32, #tpu.memory_space<vmem>>, vector<1x128xf32>
    %24 = vector.broadcast %23 : vector<1x128xf32> to vector<8x128xf32>
    %25 = arith.addf %22, %24 : vector<8x128xf32>
    %26 = arith.addf %25, %13 : vector<8x128xf32>
    %c0_22 = arith.constant 0 : index
    %c0_23 = arith.constant 0 : index
    %27 = vector.load %arg10[%c0_22, %c0_23] : memref<8x128xf32, #tpu.memory_space<vmem>>, vector<8x128xf32>
    tpu.vector_store %arg10[%c0_22, %c0_23], %26 {strides = array<i32>} : memref<8x128xf32, #tpu.memory_space<vmem>>, vector<8x128xf32>,
    return
  }
  func.func @transform_0(%arg0: i32) -> (i32, i32) {
    %c0_i32 = arith.constant 0 : i32
    %c0_i32_0 = arith.constant 0 : i32
    return %arg0, %c0_i32 : i32, i32
  }
  func.func @transform_1(%arg0: i32) -> (i32, i32) {
    %c0_i32 = arith.constant 0 : i32
    %c0_i32_0 = arith.constant 0 : i32
    %c0_i32_1 = arith.constant 0 : i32
    return %c0_i32, %c0_i32_0 : i32, i32
  }
  func.func @transform_2(%arg0: i32) -> (i32, i32) {
    %c0_i32 = arith.constant 0 : i32
    %c0_i32_0 = arith.constant 0 : i32
    %c0_i32_1 = arith.constant 0 : i32
    return %c0_i32, %c0_i32_0 : i32, i32
  }
  func.func @transform_3(%arg0: i32) -> (i32, i32) {
    %c0_i32 = arith.constant 0 : i32
    %c0_i32_0 = arith.constant 0 : i32
    %c0_i32_1 = arith.constant 0 : i32
    return %c0_i32, %c0_i32_0 : i32, i32
  }
  func.func @transform_4(%arg0: i32) -> (i32, i32) {
    %c0_i32 = arith.constant 0 : i32
    %c0_i32_0 = arith.constant 0 : i32
    %c0_i32_1 = arith.constant 0 : i32
    return %c0_i32, %c0_i32_0 : i32, i32
  }
  func.func @transform_5(%arg0: i32) -> (i32, i32) {
    %c0_i32 = arith.constant 0 : i32
    %c0_i32_0 = arith.constant 0 : i32
    %c0_i32_1 = arith.constant 0 : i32
    return %c0_i32, %c0_i32_0 : i32, i32
  }
  func.func @transform_6(%arg0: i32) -> (i32, i32) {
    %c0_i32 = arith.constant 0 : i32
    %c0_i32_0 = arith.constant 0 : i32
    %c0_i32_1 = arith.constant 0 : i32
    return %c0_i32, %c0_i32_0 : i32, i32
  }
  func.func @transform_7(%arg0: i32) -> (i32, i32) {
    %c0_i32 = arith.constant 0 : i32
    %c0_i32_0 = arith.constant 0 : i32
    %c0_i32_1 = arith.constant 0 : i32
    return %c0_i32, %c0_i32_0 : i32, i32
  }
  func.func @transform_8(%arg0: i32) -> (i32, i32) {
    %c0_i32 = arith.constant 0 : i32
    %c0_i32_0 = arith.constant 0 : i32
    %c0_i32_1 = arith.constant 0 : i32
    return %c0_i32, %c0_i32_0 : i32, i32
  }
  func.func @transform_9(%arg0: i32) -> (i32, i32) {
    %c0_i32 = arith.constant 0 : i32
    %c0_i32_0 = arith.constant 0 : i32
    return %arg0, %c0_i32 : i32, i32
  }
}

</mosaic_0001>

<llo_original>
// kernel: tpu_custom_call.1
$region0: #{tpu_custom_call.1}
  #allocation0 [shape = 'u32[]', space=smem, size = 0x4, offset = 0x4, fixed_abs, tag = 'smem constant byte address 0x4 - core index']
  #allocation1 [shape = 'u32[72,128]{1,0:T(1,128)}', space=vmem, size = 0x9000, scoped, tag = 'internal scratch']
  %s0 = inlined_call_operand.hbm [shape: f32[8,32], index: 0, kind: input, shape index: {}]
  %s1 = inlined_call_operand.hbm [shape: f32[32,128], index: 1, kind: input, shape index: {}]
  %s2 = inlined_call_operand.vmem [shape: f32[1,128], index: 2, kind: input, shape index: {}]
  %s3 = inlined_call_operand.hbm [shape: f32[128,128], index: 3, kind: input, shape index: {}]
  %s4 = inlined_call_operand.vmem [shape: f32[1,128], index: 4, kind: input, shape index: {}]
  %s5 = inlined_call_operand.hbm [shape: f32[128,128], index: 5, kind: input, shape index: {}]
  %s6 = inlined_call_operand.vmem [shape: f32[1,128], index: 6, kind: input, shape index: {}]
  %s7 = inlined_call_operand.hbm [shape: f32[128,128], index: 7, kind: input, shape index: {}]
  %s8 = inlined_call_operand.vmem [shape: f32[1,128], index: 8, kind: input, shape index: {}]
  %s9 = inlined_call_operand.hbm [shape: f32[8,128], index: 9, kind: output, shape index: {}]
  %s10 = sld [smem:[#allocation0]]
  $region66: #{tpu_custom_call.1} parent=0
    _
  %s12 = ssub.s32 1, %s10
  %s13 = scalar_select 0, %s12, %s10
  $region1: #{tpu_custom_call.1} parent=0
    #allocation2 [shape = 'u8[4096]{0}', space=vmem, size = 0x1000, scoped, tag = 'input window, operand 0, single buffered']
    #allocation3 [shape = 's32[1]{0}', space=sflag, size = 0x4, scoped, tag = 'scoped memory for tpu_custom_call.1']
    #allocation4 [shape = 's32[1]{0}', space=sflag, size = 0x4, scoped, tag = 'scoped memory for tpu_custom_call.1']
    #allocation5 [shape = 'u8[16384]{0}', space=vmem, size = 0x4000, scoped, tag = 'input window, operand 1, single buffered']
    #allocation6 [shape = 's32[1]{0}', space=sflag, size = 0x4, scoped, tag = 'scoped memory for tpu_custom_call.1']
    #allocation7 [shape = 'u8[65536]{0}', space=vmem, size = 0x10000, scoped, tag = 'input window, operand 3, single buffered']
    #allocation8 [shape = 'u8[65536]{0}', space=vmem, size = 0x10000, scoped, tag = 'input window, operand 5, single buffered']
    #allocation9 [shape = 's32[1]{0}', space=sflag, size = 0x4, scoped, tag = 'scoped memory for tpu_custom_call.1']
    #allocation10 [shape = 'u8[65536]{0}', space=vmem, size = 0x10000, scoped, tag = 'input window, operand 7, single buffered']
    #allocation11 [shape = 'u8[4096]{0}', space=vmem, size = 0x1000, scoped, tag = 'output window, operand 0, single buffered']
    %14 = vsyncpa [#allocation3], 0
    %15 = vsyncpa [#allocation6], 0
    %16 = vsyncpa [#allocation9], 0
    %17 = vsyncpa [#allocation4], 0
    // Predicated region
    $region2: #{tpu_custom_call.1} parent=1 // pred_check
      _
    $region3: #{tpu_custom_call.1} parent=1 // pred_check_branch
      %19 = sbr.rel (0) target = $region5
    $region4: #{tpu_custom_call.1} parent=1 // pred_region
      %21 = vsyncadd [#allocation3], 0
      %s23 = sshll.u32 %s0, 4
      %s24 = int_to_ptr.hbm [resolvable:$true] %s23
      %s25 = sshll.u32 [#allocation2], 4
      %s26 = int_to_ptr.vmem [resolvable:$true] %s25
      %28 = dma.hbm_to_vmem [thread:$0]  %s24, 128, %s26, [#allocation3]
    $region5: #{tpu_custom_call.1} parent=1 // pred_fallthru
      _
    // Predicated region
    $region6: #{tpu_custom_call.1} parent=1 // pred_check
      _
    $region7: #{tpu_custom_call.1} parent=1 // pred_check_branch
      %30 = sbr.rel (0) target = $region9
    $region8: #{tpu_custom_call.1} parent=1 // pred_region
      %32 = vsyncadd [#allocation6], 0
      %s33 = sshll.u32 %s1, 4
      %s34 = int_to_ptr.hbm [resolvable:$true] %s33
      %s35 = sshll.u32 [#allocation5], 4
      %s36 = int_to_ptr.vmem [resolvable:$true] %s35
      %41 = dma.hbm_to_vmem [thread:$0]  %s34, 512, %s36, [#allocation6], 128, 128, 8
    $region9: #{tpu_custom_call.1} parent=1 // pred_fallthru
      _
    // Predicated region
    $region10: #{tpu_custom_call.1} parent=1 // pred_check
      _
    $region11: #{tpu_custom_call.1} parent=1 // pred_check_branch
      %43 = sbr.rel (0) target = $region13
    $region12: #{tpu_custom_call.1} parent=1 // pred_region
      _
    $region13: #{tpu_custom_call.1} parent=1 // pred_fallthru
      _
    // Predicated region
    $region14: #{tpu_custom_call.1} parent=1 // pred_check
      _
    $region15: #{tpu_custom_call.1} parent=1 // pred_check_branch
      %45 = sbr.rel (0) target = $region17
    $region16: #{tpu_custom_call.1} parent=1 // pred_region
      %47 = vsyncadd [#allocation6], 0
      %s48 = sshll.u32 %s3, 4
      %s49 = int_to_ptr.hbm [resolvable:$true] %s48
      %s50 = sshll.u32 [#allocation7], 4
      %s51 = int_to_ptr.vmem [resolvable:$true] %s50
      %56 = dma.hbm_to_vmem [thread:$0]  %s49, 2048, %s51, [#allocation6], 128, 128, 8
    $region17: #{tpu_custom_call.1} parent=1 // pred_fallthru
      _
    // Predicated region
    $region18: #{tpu_custom_call.1} parent=1 // pred_check
      _
    $region19: #{tpu_custom_call.1} parent=1 // pred_check_branch
      %58 = sbr.rel (0) target = $region21
    $region20: #{tpu_custom_call.1} parent=1 // pred_region
      _
    $region21: #{tpu_custom_call.1} parent=1 // pred_fallthru
      _
    // Predicated region
    $region22: #{tpu_custom_call.1} parent=1 // pred_check
      _
    $region23: #{tpu_custom_call.1} parent=1 // pred_check_branch
      %60 = sbr.rel (0) target = $region25
    $region24: #{tpu_custom_call.1} parent=1 // pred_region
      %62 = vsyncadd [#allocation9], 0
      %s63 = sshll.u32 %s5, 4
      %s64 = int_to_ptr.hbm [resolvable:$true] %s63
      %s65 = sshll.u32 [#allocation8], 4
      %s66 = int_to_ptr.vmem [resolvable:$true] %s65
      %71 = dma.hbm_to_vmem [thread:$0]  %s64, 2048, %s66, [#allocation9], 128, 128, 8
    $region25: #{tpu_custom_call.1} parent=1 // pred_fallthru
      _
    // Predicated region
    $region26: #{tpu_custom_call.1} parent=1 // pred_check
      _
    $region27: #{tpu_custom_call.1} parent=1 // pred_check_branch
      %73 = sbr.rel (0) target = $region29
    $region28: #{tpu_custom_call.1} parent=1 // pred_region
      _
    $region29: #{tpu_custom_call.1} parent=1 // pred_fallthru
      _
    // Predicated region
    $region30: #{tpu_custom_call.1} parent=1 // pred_check
      _
    $region31: #{tpu_custom_call.1} parent=1 // pred_check_branch
      %75 = sbr.rel (0) target = $region33
    $region32: #{tpu_custom_call.1} parent=1 // pred_region
      %77 = vsyncadd [#allocation9], 0
      %s78 = sshll.u32 %s7, 4
      %s79 = int_to_ptr.hbm [resolvable:$true] %s78
      %s80 = sshll.u32 [#allocation10], 4
      %s81 = int_to_ptr.vmem [resolvable:$true] %s80
      %86 = dma.hbm_to_vmem [thread:$0]  %s79, 2048, %s81, [#allocation9], 128, 128, 8
    $region33: #{tpu_custom_call.1} parent=1 // pred_fallthru
      _
    // Predicated region
    $region34: #{tpu_custom_call.1} parent=1 // pred_check
      _
    $region35: #{tpu_custom_call.1} parent=1 // pred_check_branch
      %88 = sbr.rel (0) target = $region37
    $region36: #{tpu_custom_call.1} parent=1 // pred_region
      _
    $region37: #{tpu_custom_call.1} parent=1 // pred_fallthru
      _
    // Predicated region
    $region38: #{tpu_custom_call.1} parent=1 // pred_check
      _
    $region39: #{tpu_custom_call.1} parent=1 // pred_check_branch
      %90 = sbr.rel (0) target = $region41
    $region40: #{tpu_custom_call.1} parent=1 // pred_region
      %92 = dma.done [#allocation3], 128
    $region41: #{tpu_custom_call.1} parent=1 // pred_fallthru
      _
    // Predicated region
    $region42: #{tpu_custom_call.1} parent=1 // pred_check
      _
    $region43: #{tpu_custom_call.1} parent=1 // pred_check_branch
      %94 = sbr.rel (0) target = $region45
    $region44: #{tpu_custom_call.1} parent=1 // pred_region
      %96 = dma.done [#allocation6], 512
    $region45: #{tpu_custom_call.1} parent=1 // pred_fallthru
      _
    // Predicated region
    $region46: #{tpu_custom_call.1} parent=1 // pred_check
      _
    $region47: #{tpu_custom_call.1} parent=1 // pred_check_branch
      %98 = sbr.rel (0) target = $region49
    $region48: #{tpu_custom_call.1} parent=1 // pred_region
      %100 = dma.done [#allocation6], 2048
    $region49: #{tpu_custom_call.1} parent=1 // pred_fallthru
      _
    // Predicated region
    $region50: #{tpu_custom_call.1} parent=1 // pred_check
      _
    $region51: #{tpu_custom_call.1} parent=1 // pred_check_branch
      %102 = sbr.rel (0) target = $region53
    $region52: #{tpu_custom_call.1} parent=1 // pred_region
      %104 = dma.done [#allocation9], 2048
    $region53: #{tpu_custom_call.1} parent=1 // pred_fallthru
      _
    // Predicated region
    $region54: #{tpu_custom_call.1} parent=1 // pred_check
      _
    $region55: #{tpu_custom_call.1} parent=1 // pred_check_branch
      %106 = sbr.rel (0) target = $region57
    $region56: #{tpu_custom_call.1} parent=1 // pred_region
      %108 = dma.done [#allocation9], 2048
    $region57: #{tpu_custom_call.1} parent=1 // pred_fallthru
      _
    %v109 = vld [vmem:[#allocation2] sm:$0xff]
    %v110 = vld [vmem:[#allocation5] sm:$0xff]
    %v111 = vld [vmem:[#allocation5 + $0x8] sm:$0xff]
    %v112 = vld [vmem:[#allocation5 + $0x10] sm:$0xff]
    %v113 = vld [vmem:[#allocation5 + $0x18] sm:$0xff]
    %v114 = vld [vmem:[%s2] sm:$0x1]
    %v116 = vperm.slane %v114, 0
    %vm118 = vcmask 261120
    %v120 = vsel %vm118, %v109, 0
    %122 = vmatpush.msra.mxu0 0.0
    %123 = vmatpush.msra.mxu0 0.0
    %124 = vmatpush.msra.mxu0 0.0
    %125 = vmatpush.msra.mxu0 0.0
    %126 = vmatpush.msra.mxu0 0.0
    %127 = vmatpush.msra.mxu0 0.0
    %128 = vmatpush.msra.mxu0 0.0
    %129 = vmatpush.msra.mxu0 0.0
    %130 = vmatpush.msra.mxu0 0.0
    %131 = vmatpush.msra.mxu0 0.0
    %132 = vmatpush.msra.mxu0 0.0
    %133 = vmatpush.msra.mxu0 0.0
    %134 = vmatpush.msra.mxu0 %v113
    %135 = vmatpush.msra.mxu0 %v112
    %136 = vmatpush.msra.mxu0 %v111
    %137 = vmatpush.msra.mxu0 %v110
    %138 = vmatmul.f32.gmra.mxu0 %v120
    %v139 = vpop.f32.mrf.mxu0
    %v140 = vadd.f32 %v116, %v139
    %141 = vdwg.mxu0
    %v142 = vmax.f32 %v140, 0.0
    %v143 = vld [vmem:[#allocation7] sm:$0xff]
    %v144 = vld [vmem:[#allocation7 + $0x8] sm:$0xff]
    %v145 = vld [vmem:[#allocation7 + $0x10] sm:$0xff]
    %v146 = vld [vmem:[#allocation7 + $0x18] sm:$0xff]
    %v147 = vld [vmem:[#allocation7 + $0x20] sm:$0xff]
    %v148 = vld [vmem:[#allocation7 + $0x28] sm:$0xff]
    %v149 = vld [vmem:[#allocation7 + $0x30] sm:$0xff]
    %v150 = vld [vmem:[#allocation7 + $0x38] sm:$0xff]
    %v151 = vld [vmem:[#allocation7 + $0x40] sm:$0xff]
    %v152 = vld [vmem:[#allocation7 + $0x48] sm:$0xff]
    %v153 = vld [vmem:[#allocation7 + $0x50] sm:$0xff]
    %v154 = vld [vmem:[#allocation7 + $0x58] sm:$0xff]
    %v155 = vld [vmem:[#allocation7 + $0x60] sm:$0xff]
    %v156 = vld [vmem:[#allocation7 + $0x68] sm:$0xff]
    %v157 = vld [vmem:[#allocation7 + $0x70] sm:$0xff]
    %v158 = vld [vmem:[#allocation7 + $0x78] sm:$0xff]
    %v159 = vld [vmem:[%s4] sm:$0x1]
    %v161 = vperm.slane %v159, 0
    %163 = vmatpush.msra.mxu0 %v158
    %164 = vmatpush.msra.mxu0 %v157
    %165 = vmatpush.msra.mxu0 %v156
    %166 = vmatpush.msra.mxu0 %v155
    %167 = vmatpush.msra.mxu0 %v154
    %168 = vmatpush.msra.mxu0 %v153
    %169 = vmatpush.msra.mxu0 %v152
    %170 = vmatpush.msra.mxu0 %v151
    %171 = vmatpush.msra.mxu0 %v150
    %172 = vmatpush.msra.mxu0 %v149
    %173 = vmatpush.msra.mxu0 %v148
    %174 = vmatpush.msra.mxu0 %v147
    %175 = vmatpush.msra.mxu0 %v146
    %176 = vmatpush.msra.mxu0 %v145
    %177 = vmatpush.msra.mxu0 %v144
    %178 = vmatpush.msra.mxu0 %v143
    %179 = vmatmul.f32.gmra.mxu0 %v142
    %v180 = vpop.f32.mrf.mxu0
    %v181 = vadd.f32 %v161, %v180
    %182 = vdwg.mxu0
    %v183 = vtanh.pop %v181
    %v184 = vld [vmem:[#allocation8] sm:$0xff]
    %v185 = vld [vmem:[#allocation8 + $0x8] sm:$0xff]
    %v186 = vld [vmem:[#allocation8 + $0x10] sm:$0xff]
    %v187 = vld [vmem:[#allocation8 + $0x18] sm:$0xff]
    %v188 = vld [vmem:[#allocation8 + $0x20] sm:$0xff]
    %v189 = vld [vmem:[#allocation8 + $0x28] sm:$0xff]
    %v190 = vld [vmem:[#allocation8 + $0x30] sm:$0xff]
    %v191 = vld [vmem:[#allocation8 + $0x38] sm:$0xff]
    %v192 = vld [vmem:[#allocation8 + $0x40] sm:$0xff]
    %v193 = vld [vmem:[#allocation8 + $0x48] sm:$0xff]
    %v194 = vld [vmem:[#allocation8 + $0x50] sm:$0xff]
    %v195 = vld [vmem:[#allocation8 + $0x58] sm:$0xff]
    %v196 = vld [vmem:[#allocation8 + $0x60] sm:$0xff]
    %v197 = vld [vmem:[#allocation8 + $0x68] sm:$0xff]
    %v198 = vld [vmem:[#allocation8 + $0x70] sm:$0xff]
    %v199 = vld [vmem:[#allocation8 + $0x78] sm:$0xff]
    %v200 = vld [vmem:[%s6] sm:$0x1]
    %v202 = vperm.slane %v200, 0
    %204 = vmatpush.msra.mxu0 %v199
    %205 = vmatpush.msra.mxu0 %v198
    %206 = vmatpush.msra.mxu0 %v197
    %207 = vmatpush.msra.mxu0 %v196
    %208 = vmatpush.msra.mxu0 %v195
    %209 = vmatpush.msra.mxu0 %v194
    %210 = vmatpush.msra.mxu0 %v193
    %211 = vmatpush.msra.mxu0 %v192
    %212 = vmatpush.msra.mxu0 %v191
    %213 = vmatpush.msra.mxu0 %v190
    %214 = vmatpush.msra.mxu0 %v189
    %215 = vmatpush.msra.mxu0 %v188
    %216 = vmatpush.msra.mxu0 %v187
    %217 = vmatpush.msra.mxu0 %v186
    %218 = vmatpush.msra.mxu0 %v185
    %219 = vmatpush.msra.mxu0 %v184
    %220 = vmatmul.f32.gmra.mxu0 %v183
    %v221 = vpop.f32.mrf.mxu0
    %v222 = vadd.f32 %v202, %v221
    %223 = vdwg.mxu0
    %v224 = vmax.f32 %v222, 0.0
    %v225 = vld [vmem:[#allocation10] sm:$0xff]
    %v226 = vld [vmem:[#allocation10 + $0x8] sm:$0xff]
    %v227 = vld [vmem:[#allocation10 + $0x10] sm:$0xff]
    %v228 = vld [vmem:[#allocation10 + $0x18] sm:$0xff]
    %v229 = vld [vmem:[#allocation10 + $0x20] sm:$0xff]
    %v230 = vld [vmem:[#allocation10 + $0x28] sm:$0xff]
    %v231 = vld [vmem:[#allocation10 + $0x30] sm:$0xff]
    %v232 = vld [vmem:[#allocation10 + $0x38] sm:$0xff]
    %v233 = vld [vmem:[#allocation10 + $0x40] sm:$0xff]
    %v234 = vld [vmem:[#allocation10 + $0x48] sm:$0xff]
    %v235 = vld [vmem:[#allocation10 + $0x50] sm:$0xff]
    %v236 = vld [vmem:[#allocation10 + $0x58] sm:$0xff]
    %v237 = vld [vmem:[#allocation10 + $0x60] sm:$0xff]
    %v238 = vld [vmem:[#allocation10 + $0x68] sm:$0xff]
    %v239 = vld [vmem:[#allocation10 + $0x70] sm:$0xff]
    %v240 = vld [vmem:[#allocation10 + $0x78] sm:$0xff]
    %v241 = vld [vmem:[%s8] sm:$0x1]
    %v243 = vperm.slane %v241, 0
    %245 = vmatpush.msra.mxu0 %v240
    %246 = vmatpush.msra.mxu0 %v239
    %247 = vmatpush.msra.mxu0 %v238
    %248 = vmatpush.msra.mxu0 %v237
    %249 = vmatpush.msra.mxu0 %v236
    %250 = vmatpush.msra.mxu0 %v235
    %251 = vmatpush.msra.mxu0 %v234
    %252 = vmatpush.msra.mxu0 %v233
    %253 = vmatpush.msra.mxu0 %v232
    %254 = vmatpush.msra.mxu0 %v231
    %255 = vmatpush.msra.mxu0 %v230
    %256 = vmatpush.msra.mxu0 %v229
    %257 = vmatpush.msra.mxu0 %v228
    %258 = vmatpush.msra.mxu0 %v227
    %259 = vmatpush.msra.mxu0 %v226
    %260 = vmatpush.msra.mxu0 %v225
    %261 = vmatmul.f32.gmra.mxu0 %v224
    %v262 = vpop.f32.mrf.mxu0
    %v263 = vadd.f32 %v243, %v262
    %264 = vdwg.mxu0
    %v265 = vadd.f32 %v263, %v183
    %266 = vst [vmem:[#allocation11] sm:$0xff] %v265
    // Predicated region
    $region58: #{tpu_custom_call.1} parent=1 // pred_check
      _
    $region59: #{tpu_custom_call.1} parent=1 // pred_check_branch
      %268 = sbr.rel (0) target = $region61
    $region60: #{tpu_custom_call.1} parent=1 // pred_region
      %270 = vsyncadd [#allocation4], 0
      %s272 = sshll.u32 [#allocation11], 4
      %s273 = int_to_ptr.vmem [resolvable:$true] %s272
      %s274 = sshll.u32 %s9, 4
      %s275 = int_to_ptr.hbm [resolvable:$true] %s274
      %277 = dma.vmem_to_hbm [thread:$0]  %s273, 128, %s275, [#allocation4]
    $region61: #{tpu_custom_call.1} parent=1 // pred_fallthru
      _
    // Predicated region
    $region62: #{tpu_custom_call.1} parent=1 // pred_check
      _
    $region63: #{tpu_custom_call.1} parent=1 // pred_check_branch
      %279 = sbr.rel (0) target = $region65
    $region64: #{tpu_custom_call.1} parent=1 // pred_region
      %281 = dma.done [#allocation4], 128
    $region65: #{tpu_custom_call.1} parent=1 // pred_fallthru
      _
    %282 = vsyncpa [#allocation3], 1
    %283 = vsyncpa [#allocation6], 1
    %284 = vsyncpa [#allocation9], 1
    %285 = vsyncpa [#allocation4], 1

</llo_original>
